<compile_context>
chip_gen: v6e
topology: v6e:2x2x1
jax: 0.10.0
libtpu: 0.0.40
codegen_flags: <defaults>
</compile_context>

<pallas_src>
import functools
import math

import jax
import jax.numpy as jnp
from jax import lax
from jax.experimental import pallas as pl
from jax.experimental.pallas import tpu as pltpu

EPS = 1e-7

# Columns of the packed per-channel parameter block (H, 8).
_B1, _G1, _BE1, _BD, _G2, _BE2 = 0, 1, 2, 3, 4, 5


def _col(ref, c):
    return ref[:, c:c + 1]                                   # (H, 1)


def _lane_iota():
    return lax.broadcasted_iota(jnp.int32, (1, 128), 1)


def _stats_update(st_ref, y):
    """Accumulate [sum, sum_sq] of y into lanes 0/1 of the (1, 128) stats block."""
    lane = _lane_iota()
    st_ref[...] += (jnp.where(lane == 0, jnp.sum(y, keepdims=True), 0.0)
                    + jnp.where(lane == 1, jnp.sum(y * y, keepdims=True), 0.0))


def _affine_from_stats(st_ref, gamma, beta, inv_n, eps):
    """gLN as per-channel affine: scale = gamma*rsqrt(var+eps), shift = beta - mean*scale."""
    lane = _lane_iota()
    srow = st_ref[...]                                        # (1, 128)
    s = jnp.sum(jnp.where(lane == 0, srow, 0.0), axis=1, keepdims=True)   # (1, 1)
    q = jnp.sum(jnp.where(lane == 1, srow, 0.0), axis=1, keepdims=True)
    mean = s * inv_n
    var = q * inv_n - mean * mean                             # one-pass variance
    rstd = lax.rsqrt(var + eps)                               # EUP rsqrt, no divide
    scale = gamma * rstd                                      # (H, 1)
    shift = beta - mean * scale                               # (H, 1)
    return scale, shift


# --------------------------------------------------------------------------
# Pass 1: 1x1 conv (Cin->H) + PReLU -> halo-padded z1 buffer + gLN1 sums.
# Grid: (B, nT + 2); edge time-tiles (t == 0, t == nT+1) are the zero halo.
# --------------------------------------------------------------------------
def _pass1_kernel(x_ref, w1_ref, pc_ref, slope_ref, z1_ref, st_ref, *, mm_dtype):
    t = pl.program_id(1)
    last = pl.num_programs(1) - 1
    is_edge = jnp.logical_or(t == 0, t == last)

    @pl.when(t == 0)
    def _init_stats():
        st_ref[...] = jnp.zeros_like(st_ref)

    @pl.when(is_edge)
    def _zero_halo():
        # Zero halo tiles -> depthwise conv in pass 2 sees zero padding.
        z1_ref[...] = jnp.zeros_like(z1_ref)

    @pl.when(jnp.logical_not(is_edge))
    def _body():
        y = jnp.dot(w1_ref[...].astype(mm_dtype), x_ref[...].astype(mm_dtype),
                    preferred_element_type=jnp.float32)
        y = y + _col(pc_ref, _B1)
        y = jnp.where(y > 0, y, slope_ref[0] * y)             # PReLU (f32)
        z1_ref[...] = y
        _stats_update(st_ref, y)


# --------------------------------------------------------------------------
# Pass 2: gLN1 affine + depthwise conv (halo taps) + PReLU -> z2 + gLN2 sums.
# Grid: (B, nT); reads prev / cur / next tiles of the halo-padded z1.
# --------------------------------------------------------------------------
def _pass2_kernel(zp_ref, zc_ref, zn_ref, st1_ref, pc_ref, wd_ref, slope_ref,
                  z2_ref, st2_ref, *, kernel_size, dilation, inv_n, eps):
    t = pl.program_id(1)
    n_t = pl.num_programs(1)
    _, tT = zc_ref.shape
    pad = dilation * (kernel_size - 1) // 2

    scale, shift = _affine_from_stats(st1_ref, _col(pc_ref, _G1),
                                      _col(pc_ref, _BE1), inv_n, eps)

    # Normalize current + halo tiles; halos falling outside [0, T) -> 0
    # (matches PyTorch zero-padding of the gLN output).
    pfac = jnp.where(t == 0, 0.0, 1.0)
    nfac = jnp.where(t == n_t - 1, 0.0, 1.0)
    z_prev = pfac * (scale * zp_ref[...] + shift)
    z_cur = scale * zc_ref[...] + shift
    z_next = nfac * (scale * zn_ref[...] + shift)

    # Depthwise Conv1d(H->H, k, groups=H, dilation): K static taps sliced out
    # of the halo'd window (no K padded copies of the full tile).
    acc = jnp.zeros_like(z_cur)
    for j in range(kernel_size):
        off = j * dilation - pad
        if off == 0:
            tap = z_cur
        elif off < 0:
            tap = (z_prev if off == -tT else
                   jnp.concatenate([z_prev[:, tT + off:], z_cur[:, :tT + off]],
                                   axis=1))
        else:
            tap = (z_next if off == tT else
                   jnp.concatenate([z_cur[:, off:], z_next[:, :off]], axis=1))
        acc = acc + wd_ref[:, j:j + 1] * tap

    u = acc + _col(pc_ref, _BD)
    z2 = jnp.where(u > 0, u, slope_ref[1] * u)                # PReLU (f32)
    z2_ref[...] = z2

    @pl.when(t == 0)
    def _init_stats():
        st2_ref[...] = jnp.zeros_like(st2_ref)

    _stats_update(st2_ref, z2)


# --------------------------------------------------------------------------
# Pass 3: gLN2 affine + 1x1 conv (H->Cout) + residual add.  Grid: (B, nT).
# --------------------------------------------------------------------------
def _pass3_kernel(z2_ref, st2_ref, x_ref, pc_ref, w3_ref, b3_ref, o_ref, *,
                  inv_n, eps, mm_dtype):
    scale, shift = _affine_from_stats(st2_ref, _col(pc_ref, _G2),
                                      _col(pc_ref, _BE2), inv_n, eps)
    z = scale * z2_ref[...] + shift                           # gLN2 (f32)
    y = jnp.dot(w3_ref[...].astype(mm_dtype), z.astype(mm_dtype),
                preferred_element_type=jnp.float32)
    y = y + b3_ref[...]
    o_ref[...] = (y + x_ref[...]).astype(o_ref.dtype)         # residual in f32


# --------------------------------------------------------------------------
# Wrapper
# --------------------------------------------------------------------------
def _choose_time_tile(T, pad, max_tile):
    if T % 128 != 0:
        raise ValueError("time length must be a multiple of 128 (lane width)")
    cands = [t for t in range(128, T + 1, 128) if T % t == 0]
    ok = [t for t in cands if t <= max_tile and t >= pad]
    if ok:
        return max(ok)
    ok = [t for t in cands if t >= pad]
    if not ok:
        raise ValueError("depthwise receptive field exceeds sequence length")
    return min(ok)


def _compiler_params(semantics, block_f32_elems, temp_f32_elems):
    # Scoped-VMEM limit from the actual block footprint (x2 double-buffering)
    # plus in-kernel temporaries, clamped to v7x's 64 MiB physical VMEM.
    need = (2 * block_f32_elems + temp_f32_elems) * 4 + (2 << 20)
    return pltpu.CompilerParams(
        dimension_semantics=semantics,
        vmem_limit_bytes=int(min(max(need, 16 << 20), 64 << 20)))


def tcn_residual(x, params, *, kernel_size=3, dilation=1,
                 matmul_dtype=jnp.float32, max_time_tile=512):
    """x: (B, Cin, T) float32; params: dict from init_params."""
    B, Cin, T = x.shape
    H = params["w1"].shape[0]
    Cout = params["w3"].shape[0]
    if Cout != Cin:
        raise ValueError("residual requires out_channels == in_channels")
    K = kernel_size                       # expected odd (SpEx uses k=3)
    pad = dilation * (K - 1) // 2
    tT = _choose_time_tile(T, pad, max_time_tile)
    nT = T // tT
    inv_n = 1.0 / float(H * T)
    f32 = jnp.float32

    # Pack the six per-channel (H, 1) params into one (H, 8) block; PReLU
    # slopes go to SMEM (one consolidated DMA instead of many tiny blocks).
    pc = jnp.concatenate(
        [params["b1"], params["gamma1"], params["beta1"],
         params["bd"], params["gamma2"], params["beta2"],
         jnp.zeros((H, 2), f32)], axis=1).astype(f32)
    slopes = jnp.stack([params["a1"], params["a2"]]).astype(f32)   # (2,)

    full = lambda b, t: (0, 0)
    smem_spec = pl.BlockSpec(memory_space=pltpu.MemorySpace.SMEM)

    # ---- Pass 1 -----------------------------------------------------------
    z1, st1 = pl.pallas_call(
        functools.partial(_pass1_kernel, mm_dtype=matmul_dtype),
        grid=(B, nT + 2),
        in_specs=[
            pl.BlockSpec((None, Cin, tT),
                         lambda b, t: (b, 0, jnp.clip(t - 1, 0, nT - 1))),
            pl.BlockSpec((H, Cin), full),
            pl.BlockSpec((H, 8), full),
            smem_spec,
        ],
        out_specs=[
            pl.BlockSpec((None, H, tT), lambda b, t: (b, 0, t)),
            pl.BlockSpec((None, 1, 128), lambda b, t: (b, 0, 0)),
        ],
        out_shape=[
            jax.ShapeDtypeStruct((B, H, (nT + 2) * tT), f32),   # halo-padded
            jax.ShapeDtypeStruct((B, 1, 128), f32),             # [sum, sum_sq]
        ],
        compiler_params=_compiler_params(
            ("parallel", "arbitrary"),
            Cin * tT + H * Cin + H * 8 + H * tT + 128, 4 * H * tT),
    )(x, params["w1"], pc, slopes)

    # ---- Pass 2 -----------------------------------------------------------
    z2, st2 = pl.pallas_call(
        functools.partial(_pass2_kernel, kernel_size=K, dilation=dilation,
                          inv_n=inv_n, eps=EPS),
        grid=(B, nT),
        in_specs=[
            pl.BlockSpec((None, H, tT), lambda b, t: (b, 0, t)),       # prev halo
            pl.BlockSpec((None, H, tT), lambda b, t: (b, 0, t + 1)),   # current
            pl.BlockSpec((None, H, tT), lambda b, t: (b, 0, t + 2)),   # next halo
            pl.BlockSpec((None, 1, 128), lambda b, t: (b, 0, 0)),      # gLN1 stats
            pl.BlockSpec((H, 8), full),
            pl.BlockSpec((H, K), full),
            smem_spec,
        ],
        out_specs=[
            pl.BlockSpec((None, H, tT), lambda b, t: (b, 0, t)),
            pl.BlockSpec((None, 1, 128), lambda b, t: (b, 0, 0)),
        ],
        out_shape=[
            jax.ShapeDtypeStruct((B, H, T), f32),
            jax.ShapeDtypeStruct((B, 1, 128), f32),
        ],
        compiler_params=_compiler_params(
            ("parallel", "arbitrary"),
            4 * H * tT + 256 + H * 8 + H * K, 8 * H * tT),
    )(z1, z1, z1, st1, pc, params["wd"], slopes)

    # ---- Pass 3 -----------------------------------------------------------
    out = pl.pallas_call(
        functools.partial(_pass3_kernel, inv_n=inv_n, eps=EPS,
                          mm_dtype=matmul_dtype),
        grid=(B, nT),
        in_specs=[
            pl.BlockSpec((None, H, tT), lambda b, t: (b, 0, t)),
            pl.BlockSpec((None, 1, 128), lambda b, t: (b, 0, 0)),
            pl.BlockSpec((None, Cin, tT), lambda b, t: (b, 0, t)),
            pl.BlockSpec((H, 8), full),
            pl.BlockSpec((Cout, H), full),
            pl.BlockSpec((Cout, 1), full),
        ],
        out_specs=pl.BlockSpec((None, Cout, tT), lambda b, t: (b, 0, t)),
        out_shape=jax.ShapeDtypeStruct((B, Cout, T), x.dtype),
        compiler_params=_compiler_params(
            ("parallel", "parallel"),
            H * tT + 128 + Cin * tT + H * 8 + Cout * H + Cout + Cout * tT,
            4 * H * tT),
    )(z2, st2, x, pc, params["w3"], params["b3"])
    return out


# --------------------------------------------------------------------------
# Parameter init (mirrors TCN.__init__: xavier weights, zero bias,
# PReLU slope 0.25, gLN gamma=1 / beta=0) and a pure-JAX reference.
# --------------------------------------------------------------------------
def _xavier_uniform(key, shape, fan_in, fan_out):
    bound = math.sqrt(6.0 / (fan_in + fan_out))
    return jax.random.uniform(key, shape, jnp.float32, -bound, bound)


def init_params(key, in_channels, hidden, out_channels, kernel_size):
    k1, k2, k3 = jax.random.split(key, 3)
    w1 = _xavier_uniform(k1, (hidden, in_channels), in_channels, hidden)
    wd = _xavier_uniform(k2, (hidden, kernel_size),
                         1 * kernel_size, hidden * kernel_size)
    w3 = _xavier_uniform(k3, (out_channels, hidden), hidden, out_channels)
    return dict(
        w1=w1, b1=jnp.zeros((hidden, 1), jnp.float32),
        a1=jnp.array(0.25, jnp.float32),
        gamma1=jnp.ones((hidden, 1), jnp.float32),
        beta1=jnp.zeros((hidden, 1), jnp.float32),
        wd=wd, bd=jnp.zeros((hidden, 1), jnp.float32),
        a2=jnp.array(0.25, jnp.float32),
        gamma2=jnp.ones((hidden, 1), jnp.float32),
        beta2=jnp.zeros((hidden, 1), jnp.float32),
        w3=w3, b3=jnp.zeros((out_channels, 1), jnp.float32),
    )


def _reference(x, p, kernel_size, dilation):
    """Pure-JAX reference mirroring the PyTorch module."""
    def gln(y, g, b):
        m = jnp.mean(y, axis=(1, 2), keepdims=True)
        v = jnp.mean((y - m) ** 2, axis=(1, 2), keepdims=True)
        return g[None] * (y - m) / jnp.sqrt(v + EPS) + b[None]

    def prelu(y, a):
        return jnp.where(y > 0, y, a * y)

    y = jnp.einsum("hc,bct->bht", p["w1"], x) + p["b1"][None]
    y = prelu(y, p["a1"])
    y = gln(y, p["gamma1"], p["beta1"])
    pad = dilation * (kernel_size - 1) // 2
    yp = jnp.pad(y, ((0, 0), (0, 0), (pad, pad)))
    T = x.shape[-1]
    acc = jnp.zeros_like(y)
    for j in range(kernel_size):
        acc = acc + p["wd"][None, :, j:j + 1] * yp[:, :, j * dilation:j * dilation + T]
    y = acc + p["bd"][None]
    y = prelu(y, p["a2"])
    y = gln(y, p["gamma2"], p["beta2"])
    y = jnp.einsum("oh,bht->bot", p["w3"], y) + p["b3"][None]
    return y + x


if __name__ == "__main__":
    key = jax.random.PRNGKey(0)
    k1, k2, k3, k4 = jax.random.split(key, 4)

    # Config 1: single time tile (nT == 1), k=3, dilation=2.
    B, C, H, T, K, D = 2, 4, 8, 128, 3, 2
    x = jax.random.normal(k1, (B, C, T), jnp.float32)
    params = init_params(k2, C, H, C, K)
    out = jax.block_until_ready(tcn_residual(x, params, kernel_size=K, dilation=D))
    ref = _reference(x, params, K, D)
    assert out.shape == (B, C, T)
    assert jnp.allclose(out, ref, atol=2e-4, rtol=2e-4), "config-1 mismatch"

    # Config 2: multi-tile time axis (nT == 4) exercising the halo path.
    B2, C2, H2, T2, K2, D2 = 2, 4, 16, 512, 5, 3
    x2 = jax.random.normal(k3, (B2, C2, T2), jnp.float32)
    params2 = init_params(k4, C2, H2, C2, K2)
    out2 = jax.block_until_ready(
        tcn_residual(x2, params2, kernel_size=K2, dilation=D2, max_time_tile=128))
    ref2 = _reference(x2, params2, K2, D2)
    assert jnp.allclose(out2, ref2, atol=2e-4, rtol=2e-4), "config-2 mismatch"

    # Config 3: bf16 MXU inputs for the 1x1 convs (f32 accumulate / elementwise).
    out_bf = jax.block_until_ready(
        tcn_residual(x, params, kernel_size=K, dilation=D,
                     matmul_dtype=jnp.bfloat16))
    assert jnp.allclose(out_bf, ref, atol=5e-2, rtol=5e-2), "bf16-path mismatch"

    print("KERNEL_OK")
</pallas_src>

<mosaic_0001>
module attributes {stable_mosaic.version = 11 : i64} {
  func.func @_pass1_kernel(%arg0: i32, %arg1: i32, %arg2: memref<1x4x128xf32, #tpu.memory_space<vmem>>, %arg3: memref<8x4xf32, #tpu.memory_space<vmem>>, %arg4: memref<8x8xf32, #tpu.memory_space<vmem>>, %arg5: memref<2xf32, #tpu.memory_space<smem>>, %arg6: memref<1x8x128xf32, #tpu.memory_space<vmem>>, %arg7: memref<1x1x128xf32, #tpu.memory_space<vmem>>) attributes {dimension_semantics = [#tpu.dimension_semantics<parallel>, #tpu.dimension_semantics<arbitrary>], iteration_bounds = array<i64: 2, 3>, scalar_prefetch = 0 : i64, scratch_operands = 0 : i64, tpu.core_type = #tpu.core_type<tc>, window_params = [{transform_indices = @transform_0, window_bounds = array<i64: 1, 4, 128>}, {pipeline_mode = #tpu.pipeline_mode<synchronous>, transform_indices = @transform_1, window_bounds = array<i64: 8, 4>}, {pipeline_mode = #tpu.pipeline_mode<synchronous>, transform_indices = @transform_2, window_bounds = array<i64: 8, 8>}, {transform_indices = @transform_3, window_bounds = array<i64: 2>}, {transform_indices = @transform_4, window_bounds = array<i64: 1, 8, 128>}, {transform_indices = @transform_5, window_bounds = array<i64: 1, 1, 128>}]} {
    %c0_i32 = arith.constant 0 : i32
    %0 = arith.cmpi eq, %arg1, %c0_i32 : i32
    %c2_i32 = arith.constant 2 : i32
    %1 = arith.cmpi eq, %arg1, %c2_i32 : i32
    %2 = arith.ori %0, %1 : i1
    %c0_i32_0 = arith.constant 0 : i32
    %3 = arith.cmpi eq, %arg1, %c0_i32_0 : i32
    %4 = arith.extui %3 : i1 to i32
    %c0_i32_1 = arith.constant 0 : i32
    %5 = arith.cmpi ne, %4, %c0_i32_1 : i32
    scf.if %5 {
      %cst = arith.constant 0.000000e+00 : f32
      %11 = vector.broadcast %cst : f32 to vector<1x128xf32>
      %c0 = arith.constant 0 : index
      %c0_4 = arith.constant 0 : index
      %c0_5 = arith.constant 0 : index
      %12 = vector.load %arg7[%c0, %c0_4, %c0_5] : memref<1x1x128xf32, #tpu.memory_space<vmem>>, vector<1x1x128xf32>
      %13 = vector.shape_cast %12 : vector<1x1x128xf32> to vector<1x128xf32>
      %14 = vector.shape_cast %11 : vector<1x128xf32> to vector<1x1x128xf32>
      tpu.vector_store %arg7[%c0, %c0_4, %c0_5], %14 {strides = array<i32>} : memref<1x1x128xf32, #tpu.memory_space<vmem>>, vector<1x1x128xf32>,
    } else {
    }
    %6 = arith.extui %2 : i1 to i32
    %c0_i32_2 = arith.constant 0 : i32
    %7 = arith.cmpi ne, %6, %c0_i32_2 : i32
    scf.if %7 {
      %cst = arith.constant 0.000000e+00 : f32
      %11 = vector.broadcast %cst : f32 to vector<8x128xf32>
      %c0 = arith.constant 0 : index
      %c0_4 = arith.constant 0 : index
      %c0_5 = arith.constant 0 : index
      %12 = vector.load %arg6[%c0, %c0_4, %c0_5] : memref<1x8x128xf32, #tpu.memory_space<vmem>>, vector<1x8x128xf32>
      %13 = vector.shape_cast %12 : vector<1x8x128xf32> to vector<8x128xf32>
      %14 = vector.shape_cast %11 : vector<8x128xf32> to vector<1x8x128xf32>
      tpu.vector_store %arg6[%c0, %c0_4, %c0_5], %14 {strides = array<i32>} : memref<1x8x128xf32, #tpu.memory_space<vmem>>, vector<1x8x128xf32>,
    } else {
    }
    %true = arith.constant true
    %8 = arith.xori %2, %true : i1
    %9 = arith.extui %8 : i1 to i32
    %c0_i32_3 = arith.constant 0 : i32
    %10 = arith.cmpi ne, %9, %c0_i32_3 : i32
    scf.if %10 {
      %c0 = arith.constant 0 : index
      %c0_4 = arith.constant 0 : index
      %11 = vector.load %arg3[%c0, %c0_4] : memref<8x4xf32, #tpu.memory_space<vmem>>, vector<8x4xf32>
      %c0_5 = arith.constant 0 : index
      %c0_6 = arith.constant 0 : index
      %c0_7 = arith.constant 0 : index
      %12 = vector.load %arg2[%c0_5, %c0_6, %c0_7] : memref<1x4x128xf32, #tpu.memory_space<vmem>>, vector<1x4x128xf32>
      %13 = vector.shape_cast %12 : vector<1x4x128xf32> to vector<4x128xf32>
      %cst = arith.constant dense<0.000000e+00> : vector<8x128xf32>
      %14 = tpu.matmul %11, %13, %cst {dimension_numbers = #tpu.dot_dimension_numbers<[1], [0], [0], [1], [0, 0, 1, 1], [], []>} : vector<8x4xf32>, vector<4x128xf32>, vector<8x128xf32> -> vector<8x128xf32>
      %c0_8 = arith.constant 0 : index
      %c0_9 = arith.constant 0 : index
      %15 = vector.load %arg4[%c0_8, %c0_9] : memref<8x8xf32, #tpu.memory_space<vmem>>, vector<8x1xf32>
      %16 = vector.broadcast %15 : vector<8x1xf32> to vector<8x128xf32>
      %17 = arith.addf %14, %16 : vector<8x128xf32>
      %cst_10 = arith.constant 0.000000e+00 : f32
      %18 = vector.broadcast %cst_10 : f32 to vector<8x128xf32>
      %19 = arith.cmpf ogt, %17, %18 : vector<8x128xf32>
      %c0_11 = arith.constant 0 : index
      %20 = memref.load %arg5[%c0_11] : memref<2xf32, #tpu.memory_space<smem>>
      %21 = vector.broadcast %20 : f32 to vector<8x128xf32>
      %22 = arith.mulf %21, %17 : vector<8x128xf32>
      %23 = arith.select %19, %17, %22 : vector<8x128xi1>, vector<8x128xf32>
      %c0_12 = arith.constant 0 : index
      %c0_13 = arith.constant 0 : index
      %c0_14 = arith.constant 0 : index
      %24 = vector.load %arg6[%c0_12, %c0_13, %c0_14] : memref<1x8x128xf32, #tpu.memory_space<vmem>>, vector<1x8x128xf32>
      %25 = vector.shape_cast %24 : vector<1x8x128xf32> to vector<8x128xf32>
      %26 = vector.shape_cast %23 : vector<8x128xf32> to vector<1x8x128xf32>
      tpu.vector_store %arg6[%c0_12, %c0_13, %c0_14], %26 {strides = array<i32>} : memref<1x8x128xf32, #tpu.memory_space<vmem>>, vector<1x8x128xf32>,
      %27 = tpu.iota {dimensions = array<i32: 1>} : vector<1x128xi32>
      %c0_15 = arith.constant 0 : index
      %c0_16 = arith.constant 0 : index
      %c0_17 = arith.constant 0 : index
      %28 = vector.load %arg7[%c0_15, %c0_16, %c0_17] : memref<1x1x128xf32, #tpu.memory_space<vmem>>, vector<1x1x128xf32>
      %29 = vector.shape_cast %28 : vector<1x1x128xf32> to vector<1x128xf32>
      %c0_i32_18 = arith.constant 0 : i32
      %30 = vector.broadcast %c0_i32_18 : i32 to vector<1x128xi32>
      %31 = arith.cmpi eq, %27, %30 : vector<1x128xi32>
      %32 = vector.shape_cast %23 : vector<8x128xf32> to vector<1x8x128xf32>
      %cst_19 = arith.constant dense<0.000000e+00> : vector<1xf32>
      %33 = vector.multi_reduction <add>, %32, %cst_19 [1, 2] : vector<1x8x128xf32> to vector<1xf32>
      %34 = vector.shape_cast %33 : vector<1xf32> to vector<1x1x1xf32>
      %35 = vector.extract %34[0, 0, 0] : f32 from vector<1x1x1xf32>
      %36 = vector.broadcast %35 : f32 to vector<1x1xf32>
      %cst_20 = arith.constant 0.000000e+00 : f32
      %37 = vector.shape_cast %36 : vector<1x1xf32> to vector<1x1xf32>
      %38 = vector.broadcast %37 : vector<1x1xf32> to vector<1x128xf32>
      %39 = vector.broadcast %cst_20 : f32 to vector<1x128xf32>
      %40 = arith.select %31, %38, %39 : vector<1x128xi1>, vector<1x128xf32>
      %c1_i32 = arith.constant 1 : i32
      %41 = vector.broadcast %c1_i32 : i32 to vector<1x128xi32>
      %42 = arith.cmpi eq, %27, %41 : vector<1x128xi32>
      %43 = arith.mulf %23, %23 : vector<8x128xf32>
      %44 = vector.shape_cast %43 : vector<8x128xf32> to vector<1x8x128xf32>
      %cst_21 = arith.constant dense<0.000000e+00> : vector<1xf32>
      %45 = vector.multi_reduction <add>, %44, %cst_21 [1, 2] : vector<1x8x128xf32> to vector<1xf32>
      %46 = vector.shape_cast %45 : vector<1xf32> to vector<1x1x1xf32>
      %47 = vector.extract %46[0, 0, 0] : f32 from vector<1x1x1xf32>
      %48 = vector.broadcast %47 : f32 to vector<1x1xf32>
      %cst_22 = arith.constant 0.000000e+00 : f32
      %49 = vector.shape_cast %48 : vector<1x1xf32> to vector<1x1xf32>
      %50 = vector.broadcast %49 : vector<1x1xf32> to vector<1x128xf32>
      %51 = vector.broadcast %cst_22 : f32 to vector<1x128xf32>
      %52 = arith.select %42, %50, %51 : vector<1x128xi1>, vector<1x128xf32>
      %53 = arith.addf %40, %52 : vector<1x128xf32>
      %54 = arith.addf %29, %53 : vector<1x128xf32>
      %c0_23 = arith.constant 0 : index
      %c0_24 = arith.constant 0 : index
      %c0_25 = arith.constant 0 : index
      %55 = vector.load %arg7[%c0_23, %c0_24, %c0_25] : memref<1x1x128xf32, #tpu.memory_space<vmem>>, vector<1x1x128xf32>
      %56 = vector.shape_cast %55 : vector<1x1x128xf32> to vector<1x128xf32>
      %57 = vector.shape_cast %54 : vector<1x128xf32> to vector<1x1x128xf32>
      tpu.vector_store %arg7[%c0_23, %c0_24, %c0_25], %57 {strides = array<i32>} : memref<1x1x128xf32, #tpu.memory_space<vmem>>, vector<1x1x128xf32>,
    } else {
    }
    return
  }
  func.func @transform_0(%arg0: i32, %arg1: i32) -> (i32, i32, i32) {
    %c1_i32 = arith.constant 1 : i32
    %0 = arith.subi %arg1, %c1_i32 : i32
    %c0_i32 = arith.constant 0 : i32
    %c0_i32_0 = arith.constant 0 : i32
    %1 = arith.maxsi %c0_i32, %0 : i32
    %2 = arith.minsi %c0_i32_0, %1 : i32
    %c0_i32_1 = arith.constant 0 : i32
    %c0_i32_2 = arith.constant 0 : i32
    return %arg0, %c0_i32_1, %2 : i32, i32, i32
  }
  func.func @transform_1(%arg0: i32, %arg1: i32) -> (i32, i32) {
    %c0_i32 = arith.constant 0 : i32
    %c0_i32_0 = arith.constant 0 : i32
    %c0_i32_1 = arith.constant 0 : i32
    return %c0_i32, %c0_i32_0 : i32, i32
  }
  func.func @transform_2(%arg0: i32, %arg1: i32) -> (i32, i32) {
    %c0_i32 = arith.constant 0 : i32
    %c0_i32_0 = arith.constant 0 : i32
    %c0_i32_1 = arith.constant 0 : i32
    return %c0_i32, %c0_i32_0 : i32, i32
  }
  func.func @transform_3(%arg0: i32, %arg1: i32) -> i32 {
    %c0_i32 = arith.constant 0 : i32
    %c0_i32_0 = arith.constant 0 : i32
    return %c0_i32 : i32
  }
  func.func @transform_4(%arg0: i32, %arg1: i32) -> (i32, i32, i32) {
    %c0_i32 = arith.constant 0 : i32
    %c0_i32_0 = arith.constant 0 : i32
    return %arg0, %c0_i32, %arg1 : i32, i32, i32
  }
  func.func @transform_5(%arg0: i32, %arg1: i32) -> (i32, i32, i32) {
    %c0_i32 = arith.constant 0 : i32
    %c0_i32_0 = arith.constant 0 : i32
    %c0_i32_1 = arith.constant 0 : i32
    return %arg0, %c0_i32, %c0_i32_0 : i32, i32, i32
  }
}

</mosaic_0001>

<llo_original>
// kernel: tpu_custom_call.1
$region0: #{tpu_custom_call.1}
  #allocation0 [shape = 'u32[]', space=smem, size = 0x4, offset = 0x4, fixed_abs, tag = 'smem constant byte address 0x4 - core index']
  #allocation1 [shape = 'u32[144,128]{1,0:T(1,128)}', space=vmem, size = 0x12000, scoped, tag = 'internal scratch']
  %s0 = inlined_call_operand.vmem [shape: f32[2,4,128], index: 0, kind: input, shape index: {}]
  %s1 = inlined_call_operand.vmem [shape: f32[8,4], index: 1, kind: input, shape index: {}]
  %s2 = inlined_call_operand.hbm [shape: f32[8,8], index: 2, kind: input, shape index: {}]
  %s3 = inlined_call_operand.vmem [shape: f32[2], index: 3, kind: input, shape index: {}]
  %s4 = inlined_call_operand.hbm [shape: f32[2,8,384], index: 4, kind: output, shape index: {0}]
  %s5 = inlined_call_operand.hbm [shape: f32[2,1,128], index: 5, kind: output, shape index: {1}]
  %6 = xla_tuple %s4, %s5
  %s7 = sld [smem:[#allocation0]]
  $region77: #{tpu_custom_call.1} parent=0
    _
  %s9 = ssub.s32 1, %s7
  %s10 = scalar_select 0, %s9, %s7
  $region1: #{tpu_custom_call.1} parent=0
    #allocation2 [shape = 'u8[4096]{0}', space=vmem, size = 0x1000, scoped, tag = 'input window, operand 2, single buffered']
    #allocation3 [shape = 's32[2]{0}', space=sflag, size = 0x8, scoped, tag = 'scoped memory for tpu_custom_call.1']
    #allocation4 [shape = 's32[2]{0}', space=sflag, size = 0x8, scoped, tag = 'scoped memory for tpu_custom_call.1']
    #allocation5 [shape = 's32[2]{0}', space=sflag, size = 0x8, scoped, tag = 'scoped memory for tpu_custom_call.1']
    #allocation6 [shape = 'u8[512]{0}', space=smem, size = 0x200, scoped, tag = 'input window, operand 3, single buffered']
    #allocation7 [shape = 'u8[8192]{0}', space=vmem, size = 0x2000, scoped, tag = 'output window, operand 0']
    #allocation8 [shape = 'u8[1024]{0}', space=vmem, size = 0x400, scoped, tag = 'output window, operand 1']
    #allocation9 [shape = 's32[2]{0}', space=sflag, size = 0x8, scoped, tag = 'scoped memory for tpu_custom_call.1']
    %11 = vsyncpa [#allocation3], 0
    %12 = vsyncpa [#allocation5], 0
    %13 = vsyncpa [#allocation4], 0
    %s14 = scalar_lea.sflag [#allocation4], 1
    %15 = vsyncpa %s14, 0
    %16 = vsyncpa [#allocation9], 0
    %s17 = scalar_lea.sflag [#allocation9], 1
    %18 = vsyncpa %s17, 0
    loop: start=0, step=1, limit=8
    $region2: #{tpu_custom_call.1} parent=1 // loop_pre_header
      _
    $region3: #{tpu_custom_call.1} parent=1 // loop_header
      %s20 = sphi 0, %s24
      %p21 = scmp.ge.s32.totalorder %s20, 8
      %s27 = sphi 0, %s39
      %s28 = sphi 0, %s35
      %s29 = sphi 0, %s27
      %s30 = sphi 0, %s28
      %s31 = sphi 0, %s29
      %s32 = sphi 0, %s30
      %s54 = sphi 0, %s56
      %s57 = sphi 0, %s54
      %s58 = sphi 0, %s57
      %s74 = sphi 0, %s58
      %s78 = sphi 0, %s78
      %s80 = sphi 0, %s78
      %s81 = sphi 0, %s80
      %s95 = sphi 0, %s81
      %s99 = sphi 0, %s99
      %s101 = sphi 0, %s99
      %s102 = sphi 0, %s101
      %s116 = sphi 0, %s102
      %s120 = sphi 0, %s120
      %s122 = sphi 0, %s120
      %s123 = sphi 0, %s122
      %s137 = sphi 0, %s123
      %s145 = sphi 0, %s147
      %s148 = sphi 0, %s145
      %s149 = sphi 0, %s148
      %s165 = sphi 0, %s149
      %s171 = sphi 0, %s173
      %s174 = sphi 0, %s171
      %s175 = sphi 0, %s174
      %s191 = sphi 0, %s175
    $region4: #{tpu_custom_call.1} parent=1 // loop_header_branch
      %23 = sbr.rel (%p21) target = $region8
    $region5: #{tpu_custom_call.1} parent=1 // loop_body
      %s25 = ssub.s32 %s20, 1
      %s26 = ssub.s32 %s20, 2
      %s33 = sadd.s32 1, %s28
      %p34 = scmp.ge.s32.totalorder %s33, 3
      %s35 = scalar_select %p34, 0, %s33
      %s36 = sadd.s32 1, %s27
      %s37 = scalar_select %p34, %s36, %s27
      %p38 = scmp.ge.s32.totalorder %s37, 2
      %s39 = scalar_select %p38, 0, %s37
      %s40 = ssub.s32 %s28, 1
      %p41 = scmp.gt.s32.totalorder %s40, 0
      %s42 = scalar_select %p41, %s40, 0
      %p43 = scmp.lt.s32.totalorder %s42, 0
      %s44 = scalar_select %p43, %s42, 0
      %s45 = ssub.s32 %s35, 1
      %p46 = scmp.gt.s32.totalorder %s45, 0
      %s47 = scalar_select %p46, %s45, 0
      %p48 = scmp.lt.s32.totalorder %s47, 0
      %s49 = scalar_select %p48, %s47, 0
      %s50 = ssub.s32 %s27, %s39
      %s51 = ssub.s32 %s44, %s49
      %s52 = sor.u32 %s50, %s51
      %p53 = scmp.eq.s32.totalorder %s52, 0
      %s55 = sadd.s32 %s54, 1
      %s56 = scalar_select %p53, %s54, %s55
      %p59 = pneg %p53
      %p60 = scmp.eq.s32.totalorder %s20, 5
      %p61 = por %p59, %p60
      %p62 = scmp.ne.s32.totalorder %s54, %s57
      %p63 = scmp.eq.s32.totalorder %s20, 0
      %p64 = por %p62, %p63
      %p65 = scmp.ne.s32.totalorder %s54, %s57
      %p66 = scmp.eq.s32.totalorder %s25, 5
      %p67 = por %p65, %p66
      %p68 = scmp.ne.s32.totalorder %s57, %s58
      %p69 = scmp.eq.s32.totalorder %s25, 0
      %p70 = por %p68, %p69
      %p71 = scmp.ne.s32.totalorder %s57, %s58
      %p72 = scmp.eq.s32.totalorder %s26, 5
      %p73 = por %p71, %p72
      %p75 = scmp.ne.s32.totalorder %s58, %s74
      %p76 = scmp.eq.s32.totalorder %s26, 0
      %p77 = por %p75, %p76
      %s79 = sadd.s32 %s78, 1
      %p82 = scmp.eq.s32.totalorder %s20, 5
      %p83 = scmp.ne.s32.totalorder %s78, %s80
      %p84 = scmp.eq.s32.totalorder %s20, 0
      %p85 = por %p83, %p84
      %p86 = scmp.ne.s32.totalorder %s78, %s80
      %p87 = scmp.eq.s32.totalorder %s25, 5
      %p88 = por %p86, %p87
      %p89 = scmp.ne.s32.totalorder %s80, %s81
      %p90 = scmp.eq.s32.totalorder %s25, 0
      %p91 = por %p89, %p90
      %p92 = scmp.ne.s32.totalorder %s80, %s81
      %p93 = scmp.eq.s32.totalorder %s26, 5
      %p94 = por %p92, %p93
      %p96 = scmp.ne.s32.totalorder %s81, %s95
      %p97 = scmp.eq.s32.totalorder %s26, 0
      %p98 = por %p96, %p97
      %s100 = sadd.s32 %s99, 1
      %p103 = scmp.eq.s32.totalorder %s20, 5
      %p104 = scmp.ne.s32.totalorder %s99, %s101
      %p105 = scmp.eq.s32.totalorder %s20, 0
      %p106 = por %p104, %p105
      %p107 = scmp.ne.s32.totalorder %s99, %s101
      %p108 = scmp.eq.s32.totalorder %s25, 5
      %p109 = por %p107, %p108
      %p110 = scmp.ne.s32.totalorder %s101, %s102
      %p111 = scmp.eq.s32.totalorder %s25, 0
      %p112 = por %p110, %p111
      %p113 = scmp.ne.s32.totalorder %s101, %s102
      %p114 = scmp.eq.s32.totalorder %s26, 5
      %p115 = por %p113, %p114
      %p117 = scmp.ne.s32.totalorder %s102, %s116
      %p118 = scmp.eq.s32.totalorder %s26, 0
      %p119 = por %p117, %p118
      %s121 = sadd.s32 %s120, 1
      %p124 = scmp.eq.s32.totalorder %s20, 5
      %p125 = scmp.ne.s32.totalorder %s120, %s122
      %p126 = scmp.eq.s32.totalorder %s20, 0
      %p127 = por %p125, %p126
      %p128 = scmp.ne.s32.totalorder %s120, %s122
      %p129 = scmp.eq.s32.totalorder %s25, 5
      %p130 = por %p128, %p129
      %p131 = scmp.ne.s32.totalorder %s122, %s123
      %p132 = scmp.eq.s32.totalorder %s25, 0
      %p133 = por %p131, %p132
      %p134 = scmp.ne.s32.totalorder %s122, %s123
      %p135 = scmp.eq.s32.totalorder %s26, 5
      %p136 = por %p134, %p135
      %p138 = scmp.ne.s32.totalorder %s123, %s137
      %p139 = scmp.eq.s32.totalorder %s26, 0
      %p140 = por %p138, %p139
      %s141 = ssub.s32 %s27, %s39
      %s142 = ssub.s32 %s28, %s35
      %s143 = sor.u32 %s141, %s142
      %p144 = scmp.eq.s32.totalorder %s143, 0
      %s146 = sadd.s32 %s145, 1
      %s147 = scalar_select %p144, %s145, %s146
      %p150 = pneg %p144
      %p151 = scmp.eq.s32.totalorder %s20, 5
      %p152 = por %p150, %p151
      %p153 = scmp.ne.s32.totalorder %s145, %s148
      %p154 = scmp.eq.s32.totalorder %s20, 0
      %p155 = por %p153, %p154
      %p156 = scmp.ne.s32.totalorder %s145, %s148
      %p157 = scmp.eq.s32.totalorder %s25, 5
      %p158 = por %p156, %p157
      %p159 = scmp.ne.s32.totalorder %s148, %s149
      %p160 = scmp.eq.s32.totalorder %s25, 0
      %p161 = por %p159, %p160
      %p162 = scmp.ne.s32.totalorder %s148, %s149
      %p163 = scmp.eq.s32.totalorder %s26, 5
      %p164 = por %p162, %p163
      %p166 = scmp.ne.s32.totalorder %s149, %s165
      %p167 = scmp.eq.s32.totalorder %s26, 0
      %p168 = por %p166, %p167
      %s169 = ssub.s32 %s27, %s39
      %p170 = scmp.eq.s32.totalorder %s169, 0
      %s172 = sadd.s32 %s171, 1
      %s173 = scalar_select %p170, %s171, %s172
      %p176 = pneg %p170
      %p177 = scmp.eq.s32.totalorder %s20, 5
      %p178 = por %p176, %p177
      %p179 = scmp.ne.s32.totalorder %s171, %s174
      %p180 = scmp.eq.s32.totalorder %s20, 0
      %p181 = por %p179, %p180
      %p182 = scmp.ne.s32.totalorder %s171, %s174
      %p183 = scmp.eq.s32.totalorder %s25, 5
      %p184 = por %p182, %p183
      %p185 = scmp.ne.s32.totalorder %s174, %s175
      %p186 = scmp.eq.s32.totalorder %s25, 0
      %p187 = por %p185, %p186
      %p188 = scmp.ne.s32.totalorder %s174, %s175
      %p189 = scmp.eq.s32.totalorder %s26, 5
      %p190 = por %p188, %p189
      %p192 = scmp.ne.s32.totalorder %s175, %s191
      %p193 = scmp.eq.s32.totalorder %s26, 0
      %p194 = por %p192, %p193
      %p195 = scmp.le.s32.totalorder 1, %s20
      %p196 = scmp.lt.s32.totalorder %s20, 7
      %p197 = pnand %p195, %p196
      %p198 = pneg %p197
      // Predicated region
      $region9: #{tpu_custom_call.1} parent=5 // pred_check
        _
      $region10: #{tpu_custom_call.1} parent=5 // pred_check_branch
        %200 = sbr.rel (%p197) target = $region12
      $region11: #{tpu_custom_call.1} parent=5 // pred_region
        %s201 = ssub.s32 %s20, 1
        // Predicated region
        $region13: #{tpu_custom_call.1} parent=11 // pred_check
          %p202 = pneg %p91
        $region14: #{tpu_custom_call.1} parent=11 // pred_check_branch
          %204 = sbr.rel (%p202) target = $region16
        $region15: #{tpu_custom_call.1} parent=11 // pred_region
          _
        $region16: #{tpu_custom_call.1} parent=11 // pred_fallthru
          _
        // Predicated region
        $region17: #{tpu_custom_call.1} parent=11 // pred_check
          %p205 = pneg %p112
        $region18: #{tpu_custom_call.1} parent=11 // pred_check_branch
          %207 = sbr.rel (%p205) target = $region20
        $region19: #{tpu_custom_call.1} parent=11 // pred_region
          %s209 = ssub.s32 128, 128
          %210 = vsyncadd [#allocation3], %s209
          %s212 = sshll.u32 [#allocation2], 4
          %s213 = int_to_ptr.vmem [resolvable:$true] %s212
          %215 = dma.hbm_to_vmem [thread:$0]  %s2, 128, %s213, [#allocation3]
        $region20: #{tpu_custom_call.1} parent=11 // pred_fallthru
          _
        // Predicated region
        $region21: #{tpu_custom_call.1} parent=11 // pred_check
          %p216 = pneg %p133
        $region22: #{tpu_custom_call.1} parent=11 // pred_check_branch
          %218 = sbr.rel (%p216) target = $region24
        $region23: #{tpu_custom_call.1} parent=11 // pred_region
          %s220 = ssub.s32 16, 16
          %221 = vsyncadd [#allocation5], %s220
          %s223 = sshll.u32 %s3, 4
          %s224 = int_to_ptr.vmem [resolvable:$true] %s223
          %226 = dma.vmem_to_smem %s224, 16, [#allocation6], [#allocation5]
        $region24: #{tpu_custom_call.1} parent=11 // pred_fallthru
          _
      $region12: #{tpu_custom_call.1} parent=5 // pred_fallthru
        _
      %p227 = scmp.lt.s32.totalorder %s20, 6
      // Predicated region
      $region25: #{tpu_custom_call.1} parent=5 // pred_check
        %p228 = pneg %p227
      $region26: #{tpu_custom_call.1} parent=5 // pred_check_branch
        %230 = sbr.rel (%p228) target = $region28
      $region27: #{tpu_custom_call.1} parent=5 // pred_region
        // Predicated region
        $region29: #{tpu_custom_call.1} parent=27 // pred_check
          %p231 = pneg %p64
        $region30: #{tpu_custom_call.1} parent=27 // pred_check_branch
          %233 = sbr.rel (%p231) target = $region32
        $region31: #{tpu_custom_call.1} parent=27 // pred_region
          %s234 = ssub.s32 %s28, 1
          %p235 = scmp.gt.s32.totalorder %s234, 0
          %s236 = scalar_select %p235, %s234, 0
          %p237 = scmp.lt.s32.totalorder %s236, 0
          %s238 = scalar_select %p237, %s236, 0
          %p239 = scmp.lt.s32.totalorder %s27, 1
          %s240 = scalar_select %p239, %s27, 1
          %p241 = scmp.lt.s32.totalorder %s238, 0
          %s242 = scalar_select %p241, %s238, 0
          %s243 = sadd.s32 %s242, %s240
          %s244 = smul.addr %s243, 4
          %s245 = scalar_lea.vmem %s0, %s244
          %s246 = ssub.s32 %s28, 1
          %p247 = scmp.gt.s32.totalorder %s246, 0
          %s248 = scalar_select %p247, %s246, 0
          %p249 = scmp.lt.s32.totalorder %s248, 0
          %s250 = scalar_select %p249, %s248, 0
        $region32: #{tpu_custom_call.1} parent=27 // pred_fallthru
          _
      $region28: #{tpu_custom_call.1} parent=5 // pred_fallthru
        _
      %p251 = scmp.le.s32.totalorder 1, %s20
      %p252 = scmp.lt.s32.totalorder %s20, 7
      %p253 = pnand %p251, %p252
      %p254 = pneg %p253
      // Predicated region
      $region33: #{tpu_custom_call.1} parent=5 // pred_check
        _
      $region34: #{tpu_custom_call.1} parent=5 // pred_check_branch
        %256 = sbr.rel (%p253) target = $region36
      $region35: #{tpu_custom_call.1} parent=5 // pred_region
        %s257 = ssub.s32 %s20, 1
        // Predicated region
        $region37: #{tpu_custom_call.1} parent=35 // pred_check
          %p258 = pneg %p112
        $region38: #{tpu_custom_call.1} parent=35 // pred_check_branch
          %260 = sbr.rel (%p258) target = $region40
        $region39: #{tpu_custom_call.1} parent=35 // pred_region
          %261 = dma.done [#allocation3], 128
        $region40: #{tpu_custom_call.1} parent=35 // pred_fallthru
          _
        // Predicated region
        $region41: #{tpu_custom_call.1} parent=35 // pred_check
          %p262 = pneg %p133
        $region42: #{tpu_custom_call.1} parent=35 // pred_check_branch
          %264 = sbr.rel (%p262) target = $region44
        $region43: #{tpu_custom_call.1} parent=35 // pred_region
          %265 = dma.done [#allocation5], 16
        $region44: #{tpu_custom_call.1} parent=35 // pred_fallthru
          _
        %266 = sfence
        %s267 = ssub.s32 %s30, 1
        %p268 = scmp.gt.s32.totalorder %s267, 0
        %s269 = scalar_select %p268, %s267, 0
        %p270 = scmp.lt.s32.totalorder %s269, 0
        %s271 = scalar_select %p270, %s269, 0
        %p272 = scmp.lt.s32.totalorder %s29, 1
        %s273 = scalar_select %p272, %s29, 1
        %p274 = scmp.lt.s32.totalorder %s271, 0
        %s275 = scalar_select %p274, %s271, 0
        %s276 = sadd.s32 %s275, %s273
        %s277 = smul.addr %s276, 4
        %s278 = scalar_lea.vmem %s0, %s277
        %p279 = pneg %p70
        %p280 = pneg %p67
        %p281 = pneg %p91
        %p282 = pneg %p88
        %p283 = pneg %p112
        %p284 = pneg %p109
        %p285 = pneg %p133
        %p286 = pneg %p130
        %p287 = pneg %p161
        %p288 = pneg %p158
        %s289 = sand.u32 %s148, 1
        %s290 = scalar_lea.sflag [#allocation4], %s289
        %s291 = sand.u32 %s148, 1
        %s292 = smul.addr %s291, 8
        %s293 = scalar_lea.vmem [#allocation7], %s292
        %p294 = pneg %p187
        %p295 = pneg %p184
        %s296 = sand.u32 %s174, 1
        %s297 = scalar_lea.sflag [#allocation9], %s296
        %s298 = sand.u32 %s174, 1
        %s299 = scalar_lea.vmem [#allocation8], %s298
        %s300 = ssub.s32 %s30, 1
        %p301 = scmp.gt.s32.totalorder %s300, 0
        %s302 = scalar_select %p301, %s300, 0
        %p303 = scmp.lt.s32.totalorder %s302, 0
        %s304 = scalar_select %p303, %s302, 0
        %p305 = scmp.lt.s32.totalorder %s29, 1
        %s306 = scalar_select %p305, %s29, 1
        %p307 = scmp.lt.s32.totalorder %s304, 0
        %s308 = scalar_select %p307, %s304, 0
        %s309 = sadd.s32 %s308, %s306
        %s310 = smul.addr %s309, 4
        %s311 = scalar_lea.vmem %s0, %s310
        %s312 = ssub.s32 %s30, 1
        %p313 = scmp.gt.s32.totalorder %s312, 0
        %s314 = scalar_select %p313, %s312, 0
        %p315 = scmp.lt.s32.totalorder %s314, 0
        %s316 = scalar_select %p315, %s314, 0
        %p317 = scmp.eq.s32.totalorder %s30, 0
        %p318 = scmp.eq.s32.totalorder %s30, 2
        %p319 = por %p317, %p318
        // Predicated region
        $region45: #{tpu_custom_call.1} parent=35 // pred_check
          %p320 = pneg %p317
        $region46: #{tpu_custom_call.1} parent=35 // pred_check_branch
          %322 = sbr.rel (%p320) target = $region48
        $region47: #{tpu_custom_call.1} parent=35 // pred_region
          %323 = vst [vmem:[%s299] sm:$0x1] 0.0
        $region48: #{tpu_custom_call.1} parent=35 // pred_fallthru
          _
        // Predicated region
        $region49: #{tpu_custom_call.1} parent=35 // pred_check
          %p324 = pneg %p319
        $region50: #{tpu_custom_call.1} parent=35 // pred_check_branch
          %326 = sbr.rel (%p324) target = $region52
        $region51: #{tpu_custom_call.1} parent=35 // pred_region
          %327 = vst [vmem:[%s293] sm:$0xff] 0.0
        $region52: #{tpu_custom_call.1} parent=35 // pred_fallthru
          _
        %p328 = pneg %p319
        // Predicated region
        $region53: #{tpu_custom_call.1} parent=35 // pred_check
          _
        $region54: #{tpu_custom_call.1} parent=35 // pred_check_branch
          %330 = sbr.rel (%p319) target = $region56
        $region55: #{tpu_custom_call.1} parent=35 // pred_region
          %v331 = vld [vmem:[%s1] sm:$0xff]
          %v332 = vld [vmem:[%s311] sm:$0xf]
          %v333 = vld [vmem:[#allocation2] sm:$0xff]
          %335 = vset.pattern.permute.xlu0 0
          %336 = vperm.xlu0 %335, %v333
          %v337 = vpop.permute.xlu0 %336
          %vm339 = vcmask 31744
          %v341 = vsel %vm339, %v331, 0
          %vm343 = vcmask 1043456
          %v345 = vsel %vm343, %v332, 0
          %347 = vmatprep.subr.mxu0 0.0
          %348 = vmatpush1.msra.mxu0 0.0
          %349 = vmatprep.subr.mxu0 0.0
          %350 = vmatpush1.msra.mxu0 0.0
          %351 = vmatprep.subr.mxu0 0.0
          %352 = vmatpush1.msra.mxu0 0.0
          %353 = vmatprep.subr.mxu0 0.0
          %354 = vmatpush1.msra.mxu0 0.0
          %355 = vmatprep.subr.mxu0 0.0
          %356 = vmatpush1.msra.mxu0 0.0
          %357 = vmatprep.subr.mxu0 0.0
          %358 = vmatpush1.msra.mxu0 0.0
          %359 = vmatprep.subr.mxu0 0.0
          %360 = vmatpush1.msra.mxu0 0.0
          %361 = vmatprep.subr.mxu0 0.0
          %362 = vmatpush1.msra.mxu0 0.0
          %363 = vmatprep.subr.mxu0 0.0
          %364 = vmatpush1.msra.mxu0 0.0
          %365 = vmatprep.subr.mxu0 0.0
          %366 = vmatpush1.msra.mxu0 0.0
          %367 = vmatprep.subr.mxu0 0.0
          %368 = vmatpush1.msra.mxu0 0.0
          %369 = vmatprep.subr.mxu0 0.0
          %370 = vmatpush1.msra.mxu0 0.0
          %371 = vmatprep.subr.mxu0 0.0
          %372 = vmatpush1.msra.mxu0 0.0
          %373 = vmatprep.subr.mxu0 0.0
          %374 = vmatpush1.msra.mxu0 0.0
          %375 = vmatprep.subr.mxu0 0.0
          %376 = vmatpush1.msra.mxu0 0.0
          %377 = vmatprep.subr.mxu0 0.0
          %378 = vmatpush1.msra.mxu0 %v345
          %379 = vmatprep.subr.mxu0 0.0
          %380 = vmatpush2.msra.mxu0 0.0
          %381 = vmatprep.subr.mxu0 0.0
          %382 = vmatpush2.msra.mxu0 0.0
          %383 = vmatprep.subr.mxu0 0.0
          %384 = vmatpush2.msra.mxu0 0.0
          %385 = vmatprep.subr.mxu0 0.0
          %386 = vmatpush2.msra.mxu0 0.0
          %387 = vmatprep.subr.mxu0 0.0
          %388 = vmatpush2.msra.mxu0 0.0
          %389 = vmatprep.subr.mxu0 0.0
          %390 = vmatpush2.msra.mxu0 0.0
          %391 = vmatprep.subr.mxu0 0.0
          %392 = vmatpush2.msra.mxu0 0.0
          %393 = vmatprep.subr.mxu0 0.0
          %394 = vmatpush2.msra.mxu0 0.0
          %395 = vmatprep.subr.mxu0 0.0
          %396 = vmatpush2.msra.mxu0 0.0
          %397 = vmatprep.subr.mxu0 0.0
          %398 = vmatpush2.msra.mxu0 0.0
          %399 = vmatprep.subr.mxu0 0.0
          %400 = vmatpush2.msra.mxu0 0.0
          %401 = vmatprep.subr.mxu0 0.0
          %402 = vmatpush2.msra.mxu0 0.0
          %403 = vmatprep.subr.mxu0 0.0
          %404 = vmatpush2.msra.mxu0 0.0
          %405 = vmatprep.subr.mxu0 0.0
          %406 = vmatpush2.msra.mxu0 0.0
          %407 = vmatprep.subr.mxu0 0.0
          %408 = vmatpush2.msra.mxu0 0.0
          %409 = vmatprep.subr.mxu0 0.0
          %410 = vmatpush2.msra.mxu0 0.0
          %411 = vmatprep.mubr.f32.mxu0 0.0
          %412 = vmatmul.mubr.f32.gmra.mxu0 %v341
          %v413 = vpop.f32.mrf.mxu0
          %v414 = vadd.f32 %v337, %v413
          %v415 = vpop.f32.mrf.mxu0
          %416 = vdwg.mxu0
          %vm417 = vcmp.gt.f32.partialorder %v414, 0.0
          %s418 = sld [smem:[#allocation6]]
          %v419 = vstv %s418
          %v420 = vmul.f32 %v419, %v414
          %v421 = vsel %vm417, %v414, %v420
          %422 = vst [vmem:[%s293] sm:$0xff] %v421
          %v423 = vlaneseq
          %v424 = vand.u32 %v423, 127
          %v425 = vld [vmem:[%s299] sm:$0x1]
          %vm426 = vcmp.eq.s32.totalorder %v424, 0
          %427 = vadd.xlane.f32.xlu0 %v421
          %v428 = vpop.xlane.xlu0 %427
          %v429 = vrot.slane %v428, 4
          %v430 = vadd.f32 %v428, %v429
          %v431 = vrot.slane %v430, 2
          %v432 = vadd.f32 %v430, %v431
          %v433 = vrot.slane %v432, 1
          %v434 = vadd.f32 %v432, %v433
          %s435 = vtos %v434
          %v436 = vstv %s435
          %v437 = vsel %vm426, %v436, 0.0
          %vm438 = vcmp.eq.s32.totalorder %v424, 1
          %v439 = vmul.f32 %v421, %v421
          %440 = vadd.xlane.f32.xlu0 %v439
          %v441 = vpop.xlane.xlu0 %440
          %v442 = vrot.slane %v441, 4
          %v443 = vadd.f32 %v441, %v442
          %v444 = vrot.slane %v443, 2
          %v445 = vadd.f32 %v443, %v444
          %v446 = vrot.slane %v445, 1
          %v447 = vadd.f32 %v445, %v446
          %s448 = vtos %v447
          %v449 = vstv %s448
          %v450 = vsel %vm438, %v449, 0.0
          %v451 = vadd.f32 %v437, %v450
          %v452 = vadd.f32 %v425, %v451
          %453 = vst [vmem:[%s299] sm:$0x1] %v452
        $region56: #{tpu_custom_call.1} parent=35 // pred_fallthru
          _
        %s454 = sand.u32 %s148, 1
        %s455 = scalar_lea.sflag [#allocation4], %s454
        %s456 = sand.u32 %s148, 1
        %s457 = smul.addr %s456, 8
        %s458 = scalar_lea.vmem [#allocation7], %s457
        %s459 = sand.u32 %s174, 1
        %s460 = scalar_lea.sflag [#allocation9], %s459
        %s461 = sand.u32 %s174, 1
        %s462 = scalar_lea.vmem [#allocation8], %s461
        // Predicated region
        $region57: #{tpu_custom_call.1} parent=35 // pred_check
          %p463 = pneg %p158
        $region58: #{tpu_custom_call.1} parent=35 // pred_check_branch
          %465 = sbr.rel (%p463) target = $region60
        $region59: #{tpu_custom_call.1} parent=35 // pred_region
          %s467 = ssub.s32 128, 128
          %468 = vsyncadd %s455, %s467
          %s469 = smul.addr %s29, 3
          %s470 = sadd.s32 %s30, %s469
          %s471 = smul.addr %s470, 128
          %s472 = scalar_lea.hbm %s4, %s471
          %s474 = sshll.u32 %s458, 4
          %s475 = int_to_ptr.vmem [resolvable:$true] %s474
          %477 = dma.vmem_to_hbm [thread:$0]  %s475, 128, %s472, %s455
        $region60: #{tpu_custom_call.1} parent=35 // pred_fallthru
          _
        // Predicated region
        $region61: #{tpu_custom_call.1} parent=35 // pred_check
          %p478 = pneg %p184
        $region62: #{tpu_custom_call.1} parent=35 // pred_check_branch
          %480 = sbr.rel (%p478) target = $region64
        $region63: #{tpu_custom_call.1} parent=35 // pred_region
          %s482 = ssub.s32 16, 16
          %483 = vsyncadd %s460, %s482
          %s484 = smul.addr %s29, 16
          %s485 = scalar_lea.hbm %s5, %s484
          %s487 = sshll.u32 %s462, 4
          %s488 = int_to_ptr.vmem [resolvable:$true] %s487
          %490 = dma.vmem_to_hbm [thread:$0]  %s488, 16, %s485, %s460
        $region64: #{tpu_custom_call.1} parent=35 // pred_fallthru
          _
      $region36: #{tpu_custom_call.1} parent=5 // pred_fallthru
        _
      %p491 = scmp.le.s32.totalorder 2, %s20
      // Predicated region
      $region65: #{tpu_custom_call.1} parent=5 // pred_check
        %p492 = pneg %p491
      $region66: #{tpu_custom_call.1} parent=5 // pred_check_branch
        %494 = sbr.rel (%p492) target = $region68
      $region67: #{tpu_custom_call.1} parent=5 // pred_region
        %s495 = ssub.s32 %s20, 2
        // Predicated region
        $region69: #{tpu_custom_call.1} parent=67 // pred_check
          %p496 = pneg %p164
        $region70: #{tpu_custom_call.1} parent=67 // pred_check_branch
          %498 = sbr.rel (%p496) target = $region72
        $region71: #{tpu_custom_call.1} parent=67 // pred_region
          %s499 = sand.u32 %s149, 1
          %s500 = scalar_lea.sflag [#allocation4], %s499
          %s501 = sand.u32 %s149, 1
          %s502 = smul.addr %s501, 8
          %s503 = scalar_lea.vmem [#allocation7], %s502
          %504 = dma.done %s500, 128
        $region72: #{tpu_custom_call.1} parent=67 // pred_fallthru
          _
        // Predicated region
        $region73: #{tpu_custom_call.1} parent=67 // pred_check
          %p505 = pneg %p190
        $region74: #{tpu_custom_call.1} parent=67 // pred_check_branch
          %507 = sbr.rel (%p505) target = $region76
        $region75: #{tpu_custom_call.1} parent=67 // pred_region
          %s508 = sand.u32 %s175, 1
          %s509 = scalar_lea.sflag [#allocation9], %s508
          %s510 = sand.u32 %s175, 1
          %s511 = scalar_lea.vmem [#allocation8], %s510
          %512 = dma.done %s509, 16
        $region76: #{tpu_custom_call.1} parent=67 // pred_fallthru
          _
      $region68: #{tpu_custom_call.1} parent=5 // pred_fallthru
        _
    $region6: #{tpu_custom_call.1} parent=1 // loop_footer
      %s24 = sadd.s32 1, %s20
    $region7: #{tpu_custom_call.1} parent=1 // loop_footer_branch
      %19 = sbr.rel target = $region3
    $region8: #{tpu_custom_call.1} parent=1 // loop_exit
      _
    %513 = vsyncpa [#allocation3], 1
    %s514 = scalar_lea.sflag [#allocation3], 1
    %515 = vsyncpa %s514, 1
    %516 = vsyncpa [#allocation4], 1
    %s517 = scalar_lea.sflag [#allocation4], 1
    %518 = vsyncpa %s517, 1
    %519 = vsyncpa [#allocation9], 1
    %s520 = scalar_lea.sflag [#allocation9], 1
    %521 = vsyncpa %s520, 1
    %522 = vsyncpa [#allocation5], 1
    %s523 = scalar_lea.sflag [#allocation5], 1
    %524 = vsyncpa %s523, 1

</llo_original>
